<compile_context>
chip_gen: v5e
topology: v5e:2x2
jax: 0.10.0
libtpu: 0.0.40
codegen_flags: <defaults>
</compile_context>

<pallas_src>
import functools

import jax
import jax.numpy as jnp
import numpy as np
from jax.experimental import pallas as pl
from jax.experimental.pallas import tpu as pltpu


def _nearest_centroid_kernel(x_ref, neg2ct_ref, csq_ref, o_ref):
    # x_ref:      (TILE_N, D)            input rows (compute dtype, fed to MXU)
    # neg2ct_ref: (D, K_pad)             pre-transposed -2 * centroids
    # csq_ref:    (1, K_pad) float32     ||c||^2 (sentinel clusters = 3e38)
    # o_ref:      (1, TILE_N//128, 128)  lane-dense int32 cluster ids
    x = x_ref[...]

    # ||x - c||^2 up to the per-row constant ||x||^2:
    #   scores = ||c||^2 - 2 x.c   (f32 accumulation on the MXU)
    scores = csq_ref[...] + jnp.dot(
        x, neg2ct_ref[...], preferred_element_type=jnp.float32
    )  # (TILE_N, K_pad) f32

    # argmin over clusters with first-index tie-breaking (matches sklearn).
    # An all-NaN row (NaN input) maps to K_pad - 1; sklearn would raise instead.
    min_val = jnp.min(scores, axis=-1, keepdims=True)              # (TILE_N, 1)
    k_iota = jax.lax.broadcasted_iota(jnp.int32, scores.shape, 1)  # (TILE_N, K_pad)
    big = jnp.int32(scores.shape[-1] - 1)
    idx = jnp.min(jnp.where(scores == min_val, k_iota, big), axis=-1)  # (TILE_N,)

    # (TILE_N,) -> (1, TILE_N//128, 128): sublane->lane relayout through the XLU;
    # hidden under the HBM-bound x DMA at these tile sizes.
    o_ref[...] = idx.astype(jnp.int32).reshape(o_ref.shape)


def _vmem_capacity_bytes():
    """Physical VMEM of the local TPU generation (fallback: v7x-sized 64 MiB)."""
    try:
        return int(pltpu.get_tpu_info().vmem_capacity_bytes)
    except Exception:
        return 64 << 20


def _choose_tile_n(n, d, itemsize, k_pad, vmem_cap):
    """Row tile: multiple of 128, sized by bytes.

    - hard cap: ~2 MiB (v7x) / ~4 MiB (v5e/v6e) of x per tile (x2 double buffer).
    - floor: ~512 KiB of x per tile so per-grid-step overhead (~0.35 us) stays
      amortized, unless the whole problem is smaller than that.
    - aim for >= 8 grid steps so the step i+1 DMA overlaps step i compute.
    - cap so the (tile_n, K_pad) f32 argmin intermediates stay within budget.
    """
    n128 = int(pl.cdiv(max(n, 1), 128) * 128)
    bytes_per_row = max(1, d * itemsize)
    large_vmem = vmem_cap >= (96 << 20)            # v5e/v6e: 128 MiB, v7x: 64 MiB

    per_buf = (4 << 20) if large_vmem else (2 << 20)
    t_cap = max(128, (per_buf // bytes_per_row) // 128 * 128)
    t_floor = max(128, min(n128, ((512 << 10) // bytes_per_row) // 128 * 128))
    t_steps = int(pl.cdiv(pl.cdiv(n128, 8), 128) * 128)

    t = max(t_floor, min(t_cap, t_steps))

    # Bound the (tile_n, K_pad) f32 intermediates (scores / iota / select).
    inter_budget = (48 << 20) if large_vmem else (24 << 20)
    t_inter = max(128, (inter_budget // (3 * 4 * k_pad)) // 128 * 128)
    # TODO(synk): for very large codebooks (K_pad >= ~1024) tile K with an
    # online (min, argmin) carried in VMEM scratch instead of shrinking tile_n.
    return int(max(128, min(t, t_inter, n128)))


@functools.partial(jax.jit, static_argnames=("tile_n",))
def _predict_flat(x_flat, neg2ct, csq, *, tile_n):
    n_rows, d = x_flat.shape
    k_pad = neg2ct.shape[1]
    num_tiles = int(pl.cdiv(n_rows, tile_n))
    itemsize = x_flat.dtype.itemsize

    # Generation-aware scoped-VMEM budget; includes the in-kernel (tile_n, K_pad)
    # f32 intermediates that the argmin materializes.
    vmem_cap = _vmem_capacity_bytes()
    vmem_est = (
        2 * tile_n * d * itemsize                    # x tile (double buffered)
        + 2 * d * k_pad * neg2ct.dtype.itemsize      # -2*C^T (resident)
        + 2 * 8 * k_pad * 4                          # ||c||^2 row (sublane padded)
        + 2 * tile_n * 4                             # int32 output slab
        + 3 * tile_n * k_pad * 4                     # argmin intermediates
        + (2 << 20)                                  # slack
    )
    vmem_hi = (100 << 20) if vmem_cap >= (96 << 20) else (56 << 20)
    vmem_limit = int(min(max(vmem_est, 32 << 20), vmem_hi))

    # NOTE: the centroid operands have constant index_maps so they are DMA'd
    # only once; pl.Buffered(buffer_count=1) would also reclaim their second
    # VMEM buffer, but the default is kept here for portability.
    return pl.pallas_call(
        _nearest_centroid_kernel,
        out_shape=jax.ShapeDtypeStruct((num_tiles, tile_n // 128, 128), jnp.int32),
        grid=(num_tiles,),
        in_specs=[
            pl.BlockSpec((tile_n, d), lambda i: (i, 0)),   # row tile (ragged last block OK)
            pl.BlockSpec((d, k_pad), lambda i: (0, 0)),    # -2 * C^T (resident)
            pl.BlockSpec((1, k_pad), lambda i: (0, 0)),    # ||c||^2 (resident)
        ],
        out_specs=pl.BlockSpec((1, tile_n // 128, 128), lambda i: (i, 0, 0)),
        compiler_params=pltpu.CompilerParams(
            dimension_semantics=("parallel",),
            vmem_limit_bytes=vmem_limit,
        ),
    )(x_flat, neg2ct, csq)


def cluster_quantization(x, centroids, *, tile_n=None, compute_dtype=None):
    """Forward pass of ClusterQuantization (nearest-centroid predict).

    x:             (..., D) float array
    centroids:     (K, D) fitted cluster centers
    compute_dtype: optional dtype for the x @ C^T matmul (e.g. jnp.bfloat16).
                   bf16 halves x HBM traffic and is MXU-native on v5e; near-ties
                   may then resolve to a different (equally near) centroid.
    returns:       (...,) int32 cluster indices.
                   # TODO(synk): torch returns LongTensor (int64); widen at the
                   # API boundary if the caller truly needs 64-bit indices.
    """
    lead_shape = x.shape[:-1]
    d = x.shape[-1]
    n = int(np.prod(lead_shape)) if lead_shape else 1

    in_dtype = jnp.dtype(x.dtype if compute_dtype is None else compute_dtype)
    x_flat = x.reshape(n, d).astype(in_dtype)

    k = centroids.shape[0]
    k_pad = int(max(128, pl.cdiv(k, 128) * 128))

    # Hoisted centroid preprocessing (done once, outside the kernel):
    #   ||c||^2 in f32; padded clusters get a huge sentinel so they never win.
    c32 = centroids.astype(jnp.float32)
    csq = jnp.sum(c32 * c32, axis=-1)                                     # (K,)
    csq = jnp.pad(csq, (0, k_pad - k), constant_values=3e38).reshape(1, k_pad)
    #   pre-transposed -2 * C in the compute dtype (MXU consumes bf16/f32).
    c_pad = jnp.pad(centroids.astype(in_dtype), ((0, k_pad - k), (0, 0)))  # (K_pad, D)
    neg2ct = (jnp.asarray(-2.0, in_dtype) * c_pad).T                       # (D, K_pad)

    if tile_n is None:
        tile_n = _choose_tile_n(n, d, in_dtype.itemsize, k_pad, _vmem_capacity_bytes())
    assert tile_n % 128 == 0 and tile_n > 0, "tile_n must be a positive multiple of 128"

    if n < tile_n:
        # Whole problem fits in one tile: shrink it and pad the handful of tail
        # rows (n is small here, so the copy is negligible).
        tile_n = int(max(128, pl.cdiv(n, 128) * 128))
        if tile_n != n:
            x_flat = jnp.pad(x_flat, ((0, tile_n - n), (0, 0)))
    # else: n >= tile_n. No jnp.pad of x (it would cost a full extra HBM
    # read+write pass); the ragged final block is padded by Pallas and its
    # garbage tail labels are sliced off below.

    labels = _predict_flat(x_flat, neg2ct, csq, tile_n=tile_n)
    return labels.reshape(-1)[:n].reshape(lead_shape)


if __name__ == "__main__":
    key = jax.random.PRNGKey(0)
    k_x, k_c, k_x2 = jax.random.split(key, 3)

    batch, seq, hidden = 2, 8, 32
    n_clusters = 16

    x = jax.random.normal(k_x, (batch, seq, hidden), dtype=jnp.float32)
    # Deterministic "fitted" cluster centers (synthetic; no checkpoint load).
    centroids = jax.random.normal(k_c, (n_clusters, hidden), dtype=jnp.float32)

    labels = jax.block_until_ready(cluster_quantization(x, centroids))

    # Exact check against a plain-JAX nearest-centroid reference.
    d2 = jnp.sum(
        (x.reshape(-1, hidden)[:, None, :] - centroids[None, :, :]) ** 2, axis=-1
    )
    ref = jnp.argmin(d2, axis=-1).reshape(batch, seq)
    assert labels.shape == (batch, seq)
    assert bool(jnp.all(labels == ref.astype(labels.dtype)))

    # Exercise the no-pad ragged-final-block path (N=200 rows, tile_n=128).
    x2 = jax.random.normal(k_x2, (2, 100, hidden), dtype=jnp.float32)
    labels2 = jax.block_until_ready(cluster_quantization(x2, centroids, tile_n=128))
    d2b = jnp.sum(
        (x2.reshape(-1, hidden)[:, None, :] - centroids[None, :, :]) ** 2, axis=-1
    )
    ref2 = jnp.argmin(d2b, axis=-1).reshape(2, 100)
    assert labels2.shape == (2, 100)
    # Allow <=2 flips from f32 rounding of the ||c||^2 - 2x.c expansion vs the
    # direct-distance reference (near-equidistant points).
    assert int(jnp.sum(labels2 != ref2.astype(labels2.dtype))) <= 2

    # bf16 compute-path smoke test (v5e's MXU is bf16-only; halves x traffic).
    labels_bf16 = jax.block_until_ready(
        cluster_quantization(x, centroids, compute_dtype=jnp.bfloat16)
    )
    assert labels_bf16.shape == (batch, seq)

    print("KERNEL_OK")
</pallas_src>

<mosaic_0001>
module attributes {stable_mosaic.version = 11 : i64} {
  func.func @_nearest_centroid_kernel(%arg0: i32, %arg1: memref<128x32xf32, #tpu.memory_space<vmem>>, %arg2: memref<32x128xf32, #tpu.memory_space<vmem>>, %arg3: memref<1x128xf32, #tpu.memory_space<vmem>>, %arg4: memref<1x1x128xi32, #tpu.memory_space<vmem>>) attributes {dimension_semantics = [#tpu.dimension_semantics<parallel>], iteration_bounds = array<i64: 1>, scalar_prefetch = 0 : i64, scratch_operands = 0 : i64, tpu.core_type = #tpu.core_type<tc>, window_params = [{transform_indices = @transform_0, window_bounds = array<i64: 128, 32>}, {pipeline_mode = #tpu.pipeline_mode<synchronous>, transform_indices = @transform_1, window_bounds = array<i64: 32, 128>}, {pipeline_mode = #tpu.pipeline_mode<synchronous>, transform_indices = @transform_2, window_bounds = array<i64: 1, 128>}, {transform_indices = @transform_3, window_bounds = array<i64: 1, 1, 128>}]} {
    %c0 = arith.constant 0 : index
    %c0_0 = arith.constant 0 : index
    %0 = vector.load %arg1[%c0, %c0_0] : memref<128x32xf32, #tpu.memory_space<vmem>>, vector<128x32xf32>
    %c0_1 = arith.constant 0 : index
    %c0_2 = arith.constant 0 : index
    %1 = vector.load %arg3[%c0_1, %c0_2] : memref<1x128xf32, #tpu.memory_space<vmem>>, vector<1x128xf32>
    %c0_3 = arith.constant 0 : index
    %c0_4 = arith.constant 0 : index
    %2 = vector.load %arg2[%c0_3, %c0_4] : memref<32x128xf32, #tpu.memory_space<vmem>>, vector<32x128xf32>
    %cst = arith.constant dense<0.000000e+00> : vector<128x128xf32>
    %3 = tpu.matmul %0, %2, %cst {dimension_numbers = #tpu.dot_dimension_numbers<[1], [0], [0], [1], [0, 0, 1, 1], [], []>} : vector<128x32xf32>, vector<32x128xf32>, vector<128x128xf32> -> vector<128x128xf32>
    %4 = vector.broadcast %1 : vector<1x128xf32> to vector<128x128xf32>
    %5 = arith.addf %4, %3 : vector<128x128xf32>
    %cst_5 = arith.constant dense<0x7F800000> : vector<128xf32>
    %6 = vector.multi_reduction <minimumf>, %5, %cst_5 [1] : vector<128x128xf32> to vector<128xf32>
    %7 = vector.shape_cast %6 : vector<128xf32> to vector<128x1xf32>
    %8 = tpu.iota {dimensions = array<i32: 1>} : vector<128x128xi32>
    %9 = vector.broadcast %7 : vector<128x1xf32> to vector<128x128xf32>
    %10 = arith.cmpf oeq, %5, %9 : vector<128x128xf32>
    %c127_i32 = arith.constant 127 : i32
    %11 = vector.broadcast %c127_i32 : i32 to vector<128x128xi32>
    %12 = arith.select %10, %8, %11 : vector<128x128xi1>, vector<128x128xi32>
    %cst_6 = arith.constant dense<2147483647> : vector<128xi32>
    %13 = vector.multi_reduction <minsi>, %12, %cst_6 [1] : vector<128x128xi32> to vector<128xi32>
    %14 = vector.shape_cast %13 : vector<128xi32> to vector<1x1x128xi32>
    %c0_7 = arith.constant 0 : index
    %c0_8 = arith.constant 0 : index
    %c0_9 = arith.constant 0 : index
    %15 = vector.load %arg4[%c0_7, %c0_8, %c0_9] : memref<1x1x128xi32, #tpu.memory_space<vmem>>, vector<1x1x128xi32>
    tpu.vector_store %arg4[%c0_7, %c0_8, %c0_9], %14 {strides = array<i32>} : memref<1x1x128xi32, #tpu.memory_space<vmem>>, vector<1x1x128xi32>,
    return
  }
  func.func @transform_0(%arg0: i32) -> (i32, i32) {
    %c0_i32 = arith.constant 0 : i32
    %c0_i32_0 = arith.constant 0 : i32
    return %arg0, %c0_i32 : i32, i32
  }
  func.func @transform_1(%arg0: i32) -> (i32, i32) {
    %c0_i32 = arith.constant 0 : i32
    %c0_i32_0 = arith.constant 0 : i32
    %c0_i32_1 = arith.constant 0 : i32
    return %c0_i32, %c0_i32_0 : i32, i32
  }
  func.func @transform_2(%arg0: i32) -> (i32, i32) {
    %c0_i32 = arith.constant 0 : i32
    %c0_i32_0 = arith.constant 0 : i32
    %c0_i32_1 = arith.constant 0 : i32
    return %c0_i32, %c0_i32_0 : i32, i32
  }
  func.func @transform_3(%arg0: i32) -> (i32, i32, i32) {
    %c0_i32 = arith.constant 0 : i32
    %c0_i32_0 = arith.constant 0 : i32
    %c0_i32_1 = arith.constant 0 : i32
    return %arg0, %c0_i32, %c0_i32_0 : i32, i32, i32
  }
}

</mosaic_0001>

<llo_original>
// kernel: _predict_flat.1
$region0: #{_predict_flat.1}
  #allocation0 [shape = 'u32[]', space=smem, size = 0x4, offset = 0x4, fixed_abs, tag = 'smem constant byte address 0x4 - core index']
  #allocation1 [shape = 'u32[72,128]{1,0:T(1,128)}', space=vmem, size = 0x9000, scoped, tag = 'internal scratch']
  %s0 = inlined_call_operand.vmem [shape: f32[128,32], index: 0, kind: input, shape index: {}]
  %s1 = inlined_call_operand.vmem [shape: f32[32,128], index: 1, kind: input, shape index: {}]
  %s2 = inlined_call_operand.vmem [shape: f32[1,128], index: 2, kind: input, shape index: {}]
  %s3 = inlined_call_operand.hbm [shape: s32[1,1,128], index: 3, kind: output, shape index: {}]
  %s4 = sld [smem:[#allocation0]]
  $region22: #{_predict_flat.1} parent=0
    _
  %s6 = ssub.s32 1, %s4
  %s7 = scalar_select 0, %s6, %s4
  $region1: #{_predict_flat.1} parent=0
    #allocation2 [shape = 'u8[512]{0}', space=vmem, size = 0x400, scoped, tag = 'output window, operand 0, single buffered']
    #allocation3 [shape = 's32[1]{0}', space=sflag, size = 0x4, scoped, tag = 'scoped memory for _predict_flat.1']
    %8 = vsyncpa [#allocation3], 0
    // Predicated region
    $region2: #{_predict_flat.1} parent=1 // pred_check
      _
    $region3: #{_predict_flat.1} parent=1 // pred_check_branch
      %10 = sbr.rel (0) target = $region5
    $region4: #{_predict_flat.1} parent=1 // pred_region
      _
    $region5: #{_predict_flat.1} parent=1 // pred_fallthru
      _
    // Predicated region
    $region6: #{_predict_flat.1} parent=1 // pred_check
      _
    $region7: #{_predict_flat.1} parent=1 // pred_check_branch
      %12 = sbr.rel (0) target = $region9
    $region8: #{_predict_flat.1} parent=1 // pred_region
      _
    $region9: #{_predict_flat.1} parent=1 // pred_fallthru
      _
    // Predicated region
    $region10: #{_predict_flat.1} parent=1 // pred_check
      _
    $region11: #{_predict_flat.1} parent=1 // pred_check_branch
      %14 = sbr.rel (0) target = $region13
    $region12: #{_predict_flat.1} parent=1 // pred_region
      _
    $region13: #{_predict_flat.1} parent=1 // pred_fallthru
      _
    %v15 = vld [vmem:[%s0] sm:$0xff]
    %v16 = vld [vmem:[%s0 + $0x8] sm:$0xff]
    %v17 = vld [vmem:[%s0 + $0x10] sm:$0xff]
    %v18 = vld [vmem:[%s0 + $0x18] sm:$0xff]
    %v19 = vld [vmem:[%s0 + $0x20] sm:$0xff]
    %v20 = vld [vmem:[%s0 + $0x28] sm:$0xff]
    %v21 = vld [vmem:[%s0 + $0x30] sm:$0xff]
    %v22 = vld [vmem:[%s0 + $0x38] sm:$0xff]
    %v23 = vld [vmem:[%s0 + $0x40] sm:$0xff]
    %v24 = vld [vmem:[%s0 + $0x48] sm:$0xff]
    %v25 = vld [vmem:[%s0 + $0x50] sm:$0xff]
    %v26 = vld [vmem:[%s0 + $0x58] sm:$0xff]
    %v27 = vld [vmem:[%s0 + $0x60] sm:$0xff]
    %v28 = vld [vmem:[%s0 + $0x68] sm:$0xff]
    %v29 = vld [vmem:[%s0 + $0x70] sm:$0xff]
    %v30 = vld [vmem:[%s0 + $0x78] sm:$0xff]
    %v31 = vld [vmem:[%s2] sm:$0x1]
    %v32 = vld [vmem:[%s1] sm:$0xff]
    %v33 = vld [vmem:[%s1 + $0x8] sm:$0xff]
    %v34 = vld [vmem:[%s1 + $0x10] sm:$0xff]
    %v35 = vld [vmem:[%s1 + $0x18] sm:$0xff]
    %vm36 = vcmask 261120
    %v38 = vsel %vm36, %v15, 0
    %v41 = vsel %vm36, %v16, 0
    %v44 = vsel %vm36, %v17, 0
    %v47 = vsel %vm36, %v18, 0
    %v50 = vsel %vm36, %v19, 0
    %v53 = vsel %vm36, %v20, 0
    %v56 = vsel %vm36, %v21, 0
    %v59 = vsel %vm36, %v22, 0
    %v62 = vsel %vm36, %v23, 0
    %v65 = vsel %vm36, %v24, 0
    %v68 = vsel %vm36, %v25, 0
    %v71 = vsel %vm36, %v26, 0
    %v74 = vsel %vm36, %v27, 0
    %v77 = vsel %vm36, %v28, 0
    %v80 = vsel %vm36, %v29, 0
    %v83 = vsel %vm36, %v30, 0
    %85 = vmatpush.msra.mxu0 0.0
    %86 = vmatpush.msra.mxu0 0.0
    %87 = vmatpush.msra.mxu0 0.0
    %88 = vmatpush.msra.mxu0 0.0
    %89 = vmatpush.msra.mxu0 0.0
    %90 = vmatpush.msra.mxu0 0.0
    %91 = vmatpush.msra.mxu0 0.0
    %92 = vmatpush.msra.mxu0 0.0
    %93 = vmatpush.msra.mxu0 0.0
    %94 = vmatpush.msra.mxu0 0.0
    %95 = vmatpush.msra.mxu0 0.0
    %96 = vmatpush.msra.mxu0 0.0
    %97 = vmatpush.msra.mxu0 %v35
    %98 = vmatpush.msra.mxu0 %v34
    %99 = vmatpush.msra.mxu0 %v33
    %100 = vmatpush.msra.mxu0 %v32
    %101 = vmatmul.f32.gmra.mxu0 %v38
    %v102 = vpop.f32.mrf.mxu0
    %v103 = vadd.f32 0.0, %v102
    %104 = vmatmul.f32.gmra.mxu0 %v41
    %v105 = vpop.f32.mrf.mxu0
    %v106 = vadd.f32 0.0, %v105
    %107 = vmatmul.f32.gmra.mxu0 %v44
    %v108 = vpop.f32.mrf.mxu0
    %v109 = vadd.f32 0.0, %v108
    %110 = vmatmul.f32.gmra.mxu0 %v47
    %v111 = vpop.f32.mrf.mxu0
    %v112 = vadd.f32 0.0, %v111
    %113 = vmatmul.f32.gmra.mxu0 %v50
    %v114 = vpop.f32.mrf.mxu0
    %v115 = vadd.f32 0.0, %v114
    %116 = vmatmul.f32.gmra.mxu0 %v53
    %v117 = vpop.f32.mrf.mxu0
    %v118 = vadd.f32 0.0, %v117
    %119 = vmatmul.f32.gmra.mxu0 %v56
    %v120 = vpop.f32.mrf.mxu0
    %v121 = vadd.f32 0.0, %v120
    %122 = vmatmul.f32.gmra.mxu0 %v59
    %v123 = vpop.f32.mrf.mxu0
    %v124 = vadd.f32 0.0, %v123
    %125 = vmatmul.f32.gmra.mxu0 %v62
    %v126 = vpop.f32.mrf.mxu0
    %v127 = vadd.f32 0.0, %v126
    %128 = vmatmul.f32.gmra.mxu0 %v65
    %v129 = vpop.f32.mrf.mxu0
    %v130 = vadd.f32 0.0, %v129
    %131 = vmatmul.f32.gmra.mxu0 %v68
    %v132 = vpop.f32.mrf.mxu0
    %v133 = vadd.f32 0.0, %v132
    %134 = vmatmul.f32.gmra.mxu0 %v71
    %v135 = vpop.f32.mrf.mxu0
    %v136 = vadd.f32 0.0, %v135
    %137 = vmatmul.f32.gmra.mxu0 %v74
    %v138 = vpop.f32.mrf.mxu0
    %v139 = vadd.f32 0.0, %v138
    %140 = vmatmul.f32.gmra.mxu0 %v77
    %v141 = vpop.f32.mrf.mxu0
    %v142 = vadd.f32 0.0, %v141
    %143 = vmatmul.f32.gmra.mxu0 %v80
    %v144 = vpop.f32.mrf.mxu0
    %v145 = vadd.f32 0.0, %v144
    %146 = vmatmul.f32.gmra.mxu0 %v83
    %v147 = vpop.f32.mrf.mxu0
    %v148 = vadd.f32 0.0, %v147
    %149 = vdwg.mxu0
    %v151 = vperm.slane %v31, 0
    %v153 = vadd.f32 %v151, %v103
    %v154 = vadd.f32 %v151, %v106
    %v155 = vadd.f32 %v151, %v109
    %v156 = vadd.f32 %v151, %v112
    %v157 = vadd.f32 %v151, %v115
    %v158 = vadd.f32 %v151, %v118
    %v159 = vadd.f32 %v151, %v121
    %v160 = vadd.f32 %v151, %v124
    %v161 = vadd.f32 %v151, %v127
    %v162 = vadd.f32 %v151, %v130
    %v163 = vadd.f32 %v151, %v133
    %v164 = vadd.f32 %v151, %v136
    %v165 = vadd.f32 %v151, %v139
    %v166 = vadd.f32 %v151, %v142
    %v167 = vadd.f32 %v151, %v145
    %v168 = vadd.f32 %v151, %v148
    %169 = vmin.xlane.f32.xlu0 %v153
    %v170 = vpop.xlane.xlu0 %169
    %171 = vmin.xlane.f32.xlu0 %v154
    %v172 = vpop.xlane.xlu0 %171
    %173 = vmin.xlane.f32.xlu0 %v155
    %v174 = vpop.xlane.xlu0 %173
    %175 = vmin.xlane.f32.xlu0 %v156
    %v176 = vpop.xlane.xlu0 %175
    %177 = vmin.xlane.f32.xlu0 %v157
    %v178 = vpop.xlane.xlu0 %177
    %179 = vmin.xlane.f32.xlu0 %v158
    %v180 = vpop.xlane.xlu0 %179
    %181 = vmin.xlane.f32.xlu0 %v159
    %v182 = vpop.xlane.xlu0 %181
    %183 = vmin.xlane.f32.xlu0 %v160
    %v184 = vpop.xlane.xlu0 %183
    %185 = vmin.xlane.f32.xlu0 %v161
    %v186 = vpop.xlane.xlu0 %185
    %187 = vmin.xlane.f32.xlu0 %v162
    %v188 = vpop.xlane.xlu0 %187
    %189 = vmin.xlane.f32.xlu0 %v163
    %v190 = vpop.xlane.xlu0 %189
    %191 = vmin.xlane.f32.xlu0 %v164
    %v192 = vpop.xlane.xlu0 %191
    %193 = vmin.xlane.f32.xlu0 %v165
    %v194 = vpop.xlane.xlu0 %193
    %195 = vmin.xlane.f32.xlu0 %v166
    %v196 = vpop.xlane.xlu0 %195
    %197 = vmin.xlane.f32.xlu0 %v167
    %v198 = vpop.xlane.xlu0 %197
    %199 = vmin.xlane.f32.xlu0 %v168
    %v200 = vpop.xlane.xlu0 %199
    %v201 = vlaneseq
    %v202 = vand.u32 %v201, 127
    %vm203 = vcmp.eq.f32.partialorder %v153, %v170
    %vm204 = vcmp.eq.f32.partialorder %v154, %v172
    %vm205 = vcmp.eq.f32.partialorder %v155, %v174
    %vm206 = vcmp.eq.f32.partialorder %v156, %v176
    %vm207 = vcmp.eq.f32.partialorder %v157, %v178
    %vm208 = vcmp.eq.f32.partialorder %v158, %v180
    %vm209 = vcmp.eq.f32.partialorder %v159, %v182
    %vm210 = vcmp.eq.f32.partialorder %v160, %v184
    %vm211 = vcmp.eq.f32.partialorder %v161, %v186
    %vm212 = vcmp.eq.f32.partialorder %v162, %v188
    %vm213 = vcmp.eq.f32.partialorder %v163, %v190
    %vm214 = vcmp.eq.f32.partialorder %v164, %v192
    %vm215 = vcmp.eq.f32.partialorder %v165, %v194
    %vm216 = vcmp.eq.f32.partialorder %v166, %v196
    %vm217 = vcmp.eq.f32.partialorder %v167, %v198
    %vm218 = vcmp.eq.f32.partialorder %v168, %v200
    %v219 = vsel %vm203, %v202, 127
    %v220 = vsel %vm204, %v202, 127
    %v221 = vsel %vm205, %v202, 127
    %v222 = vsel %vm206, %v202, 127
    %v223 = vsel %vm207, %v202, 127
    %v224 = vsel %vm208, %v202, 127
    %v225 = vsel %vm209, %v202, 127
    %v226 = vsel %vm210, %v202, 127
    %v227 = vsel %vm211, %v202, 127
    %v228 = vsel %vm212, %v202, 127
    %v229 = vsel %vm213, %v202, 127
    %v230 = vsel %vm214, %v202, 127
    %v231 = vsel %vm215, %v202, 127
    %v232 = vsel %vm216, %v202, 127
    %v233 = vsel %vm217, %v202, 127
    %v234 = vsel %vm218, %v202, 127
    %v235 = vand.u32 %v219, 65535
    %v236 = vshra.s32 %v219, 16
    %v237 = vcvt.s32.f32 %v235
    %v238 = vcvt.s32.f32 %v236
    %239 = vmin.xlane.f32.xlu0 %v238
    %v240 = vpop.xlane.xlu0 %239
    %vm241 = vcmp.eq.f32.partialorder %v238, %v240
    %v242 = vsel %vm241, %v237, inf
    %243 = vmin.xlane.f32.xlu0 %v242
    %v244 = vpop.xlane.xlu0 %243
    %v245 = vcvt.f32.s32 %v244
    %v246 = vcvt.f32.s32 %v240
    %v247 = vshll.u32 %v246, 16
    %v248 = vadd.s32 %v247, %v245
    %v249 = vand.u32 %v220, 65535
    %v250 = vshra.s32 %v220, 16
    %v251 = vcvt.s32.f32 %v249
    %v252 = vcvt.s32.f32 %v250
    %253 = vmin.xlane.f32.xlu0 %v252
    %v254 = vpop.xlane.xlu0 %253
    %vm255 = vcmp.eq.f32.partialorder %v252, %v254
    %v256 = vsel %vm255, %v251, inf
    %257 = vmin.xlane.f32.xlu0 %v256
    %v258 = vpop.xlane.xlu0 %257
    %v259 = vcvt.f32.s32 %v258
    %v260 = vcvt.f32.s32 %v254
    %v261 = vshll.u32 %v260, 16
    %v262 = vadd.s32 %v261, %v259
    %v263 = vand.u32 %v221, 65535
    %v264 = vshra.s32 %v221, 16
    %v265 = vcvt.s32.f32 %v263
    %v266 = vcvt.s32.f32 %v264
    %267 = vmin.xlane.f32.xlu0 %v266
    %v268 = vpop.xlane.xlu0 %267
    %vm269 = vcmp.eq.f32.partialorder %v266, %v268
    %v270 = vsel %vm269, %v265, inf
    %271 = vmin.xlane.f32.xlu0 %v270
    %v272 = vpop.xlane.xlu0 %271
    %v273 = vcvt.f32.s32 %v272
    %v274 = vcvt.f32.s32 %v268
    %v275 = vshll.u32 %v274, 16
    %v276 = vadd.s32 %v275, %v273
    %v277 = vand.u32 %v222, 65535
    %v278 = vshra.s32 %v222, 16
    %v279 = vcvt.s32.f32 %v277
    %v280 = vcvt.s32.f32 %v278
    %281 = vmin.xlane.f32.xlu0 %v280
    %v282 = vpop.xlane.xlu0 %281
    %vm283 = vcmp.eq.f32.partialorder %v280, %v282
    %v284 = vsel %vm283, %v279, inf
    %285 = vmin.xlane.f32.xlu0 %v284
    %v286 = vpop.xlane.xlu0 %285
    %v287 = vcvt.f32.s32 %v286
    %v288 = vcvt.f32.s32 %v282
    %v289 = vshll.u32 %v288, 16
    %v290 = vadd.s32 %v289, %v287
    %v291 = vand.u32 %v223, 65535
    %v292 = vshra.s32 %v223, 16
    %v293 = vcvt.s32.f32 %v291
    %v294 = vcvt.s32.f32 %v292
    %295 = vmin.xlane.f32.xlu0 %v294
    %v296 = vpop.xlane.xlu0 %295
    %vm297 = vcmp.eq.f32.partialorder %v294, %v296
    %v298 = vsel %vm297, %v293, inf
    %299 = vmin.xlane.f32.xlu0 %v298
    %v300 = vpop.xlane.xlu0 %299
    %v301 = vcvt.f32.s32 %v300
    %v302 = vcvt.f32.s32 %v296
    %v303 = vshll.u32 %v302, 16
    %v304 = vadd.s32 %v303, %v301
    %v305 = vand.u32 %v224, 65535
    %v306 = vshra.s32 %v224, 16
    %v307 = vcvt.s32.f32 %v305
    %v308 = vcvt.s32.f32 %v306
    %309 = vmin.xlane.f32.xlu0 %v308
    %v310 = vpop.xlane.xlu0 %309
    %vm311 = vcmp.eq.f32.partialorder %v308, %v310
    %v312 = vsel %vm311, %v307, inf
    %313 = vmin.xlane.f32.xlu0 %v312
    %v314 = vpop.xlane.xlu0 %313
    %v315 = vcvt.f32.s32 %v314
    %v316 = vcvt.f32.s32 %v310
    %v317 = vshll.u32 %v316, 16
    %v318 = vadd.s32 %v317, %v315
    %v319 = vand.u32 %v225, 65535
    %v320 = vshra.s32 %v225, 16
    %v321 = vcvt.s32.f32 %v319
    %v322 = vcvt.s32.f32 %v320
    %323 = vmin.xlane.f32.xlu0 %v322
    %v324 = vpop.xlane.xlu0 %323
    %vm325 = vcmp.eq.f32.partialorder %v322, %v324
    %v326 = vsel %vm325, %v321, inf
    %327 = vmin.xlane.f32.xlu0 %v326
    %v328 = vpop.xlane.xlu0 %327
    %v329 = vcvt.f32.s32 %v328
    %v330 = vcvt.f32.s32 %v324
    %v331 = vshll.u32 %v330, 16
    %v332 = vadd.s32 %v331, %v329
    %v333 = vand.u32 %v226, 65535
    %v334 = vshra.s32 %v226, 16
    %v335 = vcvt.s32.f32 %v333
    %v336 = vcvt.s32.f32 %v334
    %337 = vmin.xlane.f32.xlu0 %v336
    %v338 = vpop.xlane.xlu0 %337
    %vm339 = vcmp.eq.f32.partialorder %v336, %v338
    %v340 = vsel %vm339, %v335, inf
    %341 = vmin.xlane.f32.xlu0 %v340
    %v342 = vpop.xlane.xlu0 %341
    %v343 = vcvt.f32.s32 %v342
    %v344 = vcvt.f32.s32 %v338
    %v345 = vshll.u32 %v344, 16
    %v346 = vadd.s32 %v345, %v343
    %v347 = vand.u32 %v227, 65535
    %v348 = vshra.s32 %v227, 16
    %v349 = vcvt.s32.f32 %v347
    %v350 = vcvt.s32.f32 %v348
    %351 = vmin.xlane.f32.xlu0 %v350
    %v352 = vpop.xlane.xlu0 %351
    %vm353 = vcmp.eq.f32.partialorder %v350, %v352
    %v354 = vsel %vm353, %v349, inf
    %355 = vmin.xlane.f32.xlu0 %v354
    %v356 = vpop.xlane.xlu0 %355
    %v357 = vcvt.f32.s32 %v356
    %v358 = vcvt.f32.s32 %v352
    %v359 = vshll.u32 %v358, 16
    %v360 = vadd.s32 %v359, %v357
    %v361 = vand.u32 %v228, 65535
    %v362 = vshra.s32 %v228, 16
    %v363 = vcvt.s32.f32 %v361
    %v364 = vcvt.s32.f32 %v362
    %365 = vmin.xlane.f32.xlu0 %v364
    %v366 = vpop.xlane.xlu0 %365
    %vm367 = vcmp.eq.f32.partialorder %v364, %v366
    %v368 = vsel %vm367, %v363, inf
    %369 = vmin.xlane.f32.xlu0 %v368
    %v370 = vpop.xlane.xlu0 %369
    %v371 = vcvt.f32.s32 %v370
    %v372 = vcvt.f32.s32 %v366
    %v373 = vshll.u32 %v372, 16
    %v374 = vadd.s32 %v373, %v371
    %v375 = vand.u32 %v229, 65535
    %v376 = vshra.s32 %v229, 16
    %v377 = vcvt.s32.f32 %v375
    %v378 = vcvt.s32.f32 %v376
    %379 = vmin.xlane.f32.xlu0 %v378
    %v380 = vpop.xlane.xlu0 %379
    %vm381 = vcmp.eq.f32.partialorder %v378, %v380
    %v382 = vsel %vm381, %v377, inf
    %383 = vmin.xlane.f32.xlu0 %v382
    %v384 = vpop.xlane.xlu0 %383
    %v385 = vcvt.f32.s32 %v384
    %v386 = vcvt.f32.s32 %v380
    %v387 = vshll.u32 %v386, 16
    %v388 = vadd.s32 %v387, %v385
    %v389 = vand.u32 %v230, 65535
    %v390 = vshra.s32 %v230, 16
    %v391 = vcvt.s32.f32 %v389
    %v392 = vcvt.s32.f32 %v390
    %393 = vmin.xlane.f32.xlu0 %v392
    %v394 = vpop.xlane.xlu0 %393
    %vm395 = vcmp.eq.f32.partialorder %v392, %v394
    %v396 = vsel %vm395, %v391, inf
    %397 = vmin.xlane.f32.xlu0 %v396
    %v398 = vpop.xlane.xlu0 %397
    %v399 = vcvt.f32.s32 %v398
    %v400 = vcvt.f32.s32 %v394
    %v401 = vshll.u32 %v400, 16
    %v402 = vadd.s32 %v401, %v399
    %v403 = vand.u32 %v231, 65535
    %v404 = vshra.s32 %v231, 16
    %v405 = vcvt.s32.f32 %v403
    %v406 = vcvt.s32.f32 %v404
    %407 = vmin.xlane.f32.xlu0 %v406
    %v408 = vpop.xlane.xlu0 %407
    %vm409 = vcmp.eq.f32.partialorder %v406, %v408
    %v410 = vsel %vm409, %v405, inf
    %411 = vmin.xlane.f32.xlu0 %v410
    %v412 = vpop.xlane.xlu0 %411
    %v413 = vcvt.f32.s32 %v412
    %v414 = vcvt.f32.s32 %v408
    %v415 = vshll.u32 %v414, 16
    %v416 = vadd.s32 %v415, %v413
    %v417 = vand.u32 %v232, 65535
    %v418 = vshra.s32 %v232, 16
    %v419 = vcvt.s32.f32 %v417
    %v420 = vcvt.s32.f32 %v418
    %421 = vmin.xlane.f32.xlu0 %v420
    %v422 = vpop.xlane.xlu0 %421
    %vm423 = vcmp.eq.f32.partialorder %v420, %v422
    %v424 = vsel %vm423, %v419, inf
    %425 = vmin.xlane.f32.xlu0 %v424
    %v426 = vpop.xlane.xlu0 %425
    %v427 = vcvt.f32.s32 %v426
    %v428 = vcvt.f32.s32 %v422
    %v429 = vshll.u32 %v428, 16
    %v430 = vadd.s32 %v429, %v427
    %v431 = vand.u32 %v233, 65535
    %v432 = vshra.s32 %v233, 16
    %v433 = vcvt.s32.f32 %v431
    %v434 = vcvt.s32.f32 %v432
    %435 = vmin.xlane.f32.xlu0 %v434
    %v436 = vpop.xlane.xlu0 %435
    %vm437 = vcmp.eq.f32.partialorder %v434, %v436
    %v438 = vsel %vm437, %v433, inf
    %439 = vmin.xlane.f32.xlu0 %v438
    %v440 = vpop.xlane.xlu0 %439
    %v441 = vcvt.f32.s32 %v440
    %v442 = vcvt.f32.s32 %v436
    %v443 = vshll.u32 %v442, 16
    %v444 = vadd.s32 %v443, %v441
    %v445 = vand.u32 %v234, 65535
    %v446 = vshra.s32 %v234, 16
    %v447 = vcvt.s32.f32 %v445
    %v448 = vcvt.s32.f32 %v446
    %449 = vmin.xlane.f32.xlu0 %v448
    %v450 = vpop.xlane.xlu0 %449
    %vm451 = vcmp.eq.f32.partialorder %v448, %v450
    %v452 = vsel %vm451, %v447, inf
    %453 = vmin.xlane.f32.xlu0 %v452
    %v454 = vpop.xlane.xlu0 %453
    %v455 = vcvt.f32.s32 %v454
    %v456 = vcvt.f32.s32 %v450
    %v457 = vshll.u32 %v456, 16
    %v458 = vadd.s32 %v457, %v455
    %v459 = vperm.slane %v248, %v202
    %v460 = vadd.s32 %v202, 4294967288
    %v461 = vperm.slane %v262, %v460
    %vm462 = vcmask 130112
    %v463 = vsel %vm462, %v461, %v459
    %v464 = vadd.s32 %v202, 4294967280
    %v465 = vperm.slane %v276, %v464
    %vm466 = vcmask 195712
    %v467 = vsel %vm466, %v465, %v463
    %v468 = vadd.s32 %v202, 4294967272
    %v469 = vperm.slane %v290, %v468
    %vm470 = vcmask 261312
    %v471 = vsel %vm470, %v469, %v467
    %v472 = vadd.s32 %v202, 4294967264
    %v473 = vperm.slane %v304, %v472
    %vm474 = vcmask 326912
    %v475 = vsel %vm474, %v473, %v471
    %v476 = vadd.s32 %v202, 4294967256
    %v477 = vperm.slane %v318, %v476
    %vm478 = vcmask 392512
    %v479 = vsel %vm478, %v477, %v475
    %v480 = vadd.s32 %v202, 4294967248
    %v481 = vperm.slane %v332, %v480
    %vm482 = vcmask 458112
    %v483 = vsel %vm482, %v481, %v479
    %v484 = vadd.s32 %v202, 4294967240
    %v485 = vperm.slane %v346, %v484
    %vm486 = vcmask 523712
    %v487 = vsel %vm486, %v485, %v483
    %v488 = vadd.s32 %v202, 4294967232
    %v489 = vperm.slane %v360, %v488
    %vm490 = vcmask 589312
    %v491 = vsel %vm490, %v489, %v487
    %v492 = vadd.s32 %v202, 4294967224
    %v493 = vperm.slane %v374, %v492
    %vm494 = vcmask 654912
    %v495 = vsel %vm494, %v493, %v491
    %v496 = vadd.s32 %v202, 4294967216
    %v497 = vperm.slane %v388, %v496
    %vm498 = vcmask 720512
    %v499 = vsel %vm498, %v497, %v495
    %v500 = vadd.s32 %v202, 4294967208
    %v501 = vperm.slane %v402, %v500
    %vm502 = vcmask 786112
    %v503 = vsel %vm502, %v501, %v499
    %v504 = vadd.s32 %v202, 4294967200
    %v505 = vperm.slane %v416, %v504
    %vm506 = vcmask 851712
    %v507 = vsel %vm506, %v505, %v503
    %v508 = vadd.s32 %v202, 4294967192
    %v509 = vperm.slane %v430, %v508
    %vm510 = vcmask 917312
    %v511 = vsel %vm510, %v509, %v507
    %v512 = vadd.s32 %v202, 4294967184
    %v513 = vperm.slane %v444, %v512
    %vm514 = vcmask 982912
    %v515 = vsel %vm514, %v513, %v511
    %v516 = vadd.s32 %v202, 4294967176
    %v517 = vperm.slane %v458, %v516
    %vm518 = vcmask 1048512
    %v519 = vsel %vm518, %v517, %v515
    %520 = vst [vmem:[#allocation2] sm:$0x1] %v519
    // Predicated region
    $region14: #{_predict_flat.1} parent=1 // pred_check
      _
    $region15: #{_predict_flat.1} parent=1 // pred_check_branch
      %522 = sbr.rel (0) target = $region17
    $region16: #{_predict_flat.1} parent=1 // pred_region
      %524 = vsyncadd [#allocation3], 0
      %s526 = sshll.u32 [#allocation2], 4
      %s527 = int_to_ptr.vmem [resolvable:$true] %s526
      %s528 = sshll.u32 %s3, 4
      %s529 = int_to_ptr.hbm [resolvable:$true] %s528
      %531 = dma.vmem_to_hbm [thread:$0]  %s527, 16, %s529, [#allocation3]
    $region17: #{_predict_flat.1} parent=1 // pred_fallthru
      _
    // Predicated region
    $region18: #{_predict_flat.1} parent=1 // pred_check
      _
    $region19: #{_predict_flat.1} parent=1 // pred_check_branch
      %533 = sbr.rel (0) target = $region21
    $region20: #{_predict_flat.1} parent=1 // pred_region
      %535 = dma.done [#allocation3], 16
    $region21: #{_predict_flat.1} parent=1 // pred_fallthru
      _
    %536 = vsyncpa [#allocation3], 1

</llo_original>
